<compile_context>
chip_gen: v6e
topology: v6e:2x2x1
jax: 0.10.0
libtpu: 0.0.40
codegen_flags: <defaults>
</compile_context>

<pallas_src>
import functools
import numpy as np
import jax
import jax.numpy as jnp
from jax import lax
from jax.experimental import pallas as pl
from jax.experimental.pallas import tpu as pltpu

LRELU_ALPHA = 0.2
LRELU_GAIN = float(np.sqrt(2.0))  # bias_act def_gain for 'lrelu'


def _round_up(x, m):
    return (x + m - 1) // m * m


def _vmem_limit_bytes():
    """~3/4 of physical VMEM, capped at 96 MiB (v5e/v6e -> 96 MiB, v7x -> 48 MiB)."""
    cap = 64 * 1024 * 1024
    try:
        info = pltpu.get_tpu_info()
        cap = int(getattr(info, "vmem_capacity_bytes", cap))
    except Exception:
        pass
    return int(min(cap * 3 // 4, 96 * 1024 * 1024))


# ---------------- Kernel 1: minibatch-std statistic (VPU reduction) ----------
def mbstd_kernel(x_ref, o_ref, *, group_size):
    """x_ref: (G, M, D) f32 — leading-axis (free) indexing over the group dim.
       o_ref: (M, 128) f32 — lane-dense broadcast of the per-slot statistic."""
    G = group_size
    x0 = x_ref[0]
    s = x0
    for g in range(1, G):
        s = s + x_ref[g]
    mu = s * (1.0 / G)
    d = x0 - mu
    v = d * d
    for g in range(1, G):
        d = x_ref[g] - mu
        v = v + d * d
    std = jnp.sqrt(v * (1.0 / G) + 1e-8)                 # (M, D)
    stat = jnp.mean(std, axis=1, keepdims=True)          # (M, 1)
    o_ref[...] = jnp.broadcast_to(stat, o_ref.shape)


# ---------------- Kernel 2: 3x3 conv (pad=1) + bias + lrelu, B images/step ---
def conv3x3_kernel(x_ref, w_ref, b_ref, o_ref, y_ref, *, H, W, scale):
    """x_ref : (B, R2, Cin_p)  spatially padded NHWC images, rows flattened (bf16)
       w_ref : (9, Cin_p, C)   un-scaled weights (kh*3+kw, cin, cout), resident
       b_ref : (1, C)          bias pre-scaled by act_gain (f32)
       o_ref : (B, H*W, C)     COMPACT conv output (bf16)
       y_ref : (B*Mo, C)       VMEM scratch on the padded-width row grid (bf16)
    """
    B = x_ref.shape[0]
    Cin_p = x_ref.shape[-1]
    C = o_ref.shape[-1]
    Wp = W + 2
    Mo = H * Wp

    acc = jnp.zeros((B * Mo, C), jnp.float32)
    for kh in range(3):
        for kw in range(3):
            sh = kh * Wp + kw                            # static row shift
            if B == 1:
                xs = x_ref[0, sh:sh + Mo, :]
            else:
                xs = x_ref[:, sh:sh + Mo, :].reshape(B * Mo, Cin_p)
            acc = acc + jnp.dot(xs, w_ref[kh * 3 + kw],
                                preferred_element_type=jnp.float32)

    # act_gain folded into `scale` and the bias (lrelu is positively homogeneous).
    y = acc * scale + b_ref[...]
    y = jnp.where(y >= 0.0, y, y * LRELU_ALPHA)
    y_ref[...] = y.astype(y_ref.dtype)

    # In-kernel compaction: drop the 2 junk columns of every padded-width row so
    # the HBM store is lane-dense and unpadded (ref-slice copies via scratch).
    for b in range(B):
        for h in range(H):
            src = b * Mo + h * Wp
            o_ref[b, h * W:(h + 1) * W, :] = y_ref[src:src + W, :]


# ---------------- Kernel 3: K-tiled fc + out + cmap projection ---------------
def head_kernel(xf_ref, fw_ref, fb_ref, ow_ref, ob_ref, cmap_ref, o_ref, acc_ref,
                *, fc_scale, out_gain, cmap_scale):
    k = pl.program_id(0)

    @pl.when(k == 0)
    def _():
        acc_ref[...] = jnp.zeros_like(acc_ref)

    acc_ref[...] += jnp.dot(xf_ref[...], fw_ref[...],
                            preferred_element_type=jnp.float32)

    @pl.when(k == pl.num_programs(0) - 1)
    def _():
        h = acc_ref[...] * fc_scale + fb_ref[...]        # bias pre-scaled by act_gain
        h = jnp.where(h >= 0.0, h, h * LRELU_ALPHA)      # lrelu (gain folded in)
        o = jnp.dot(h, ow_ref[...], preferred_element_type=jnp.float32)
        o = o * out_gain + ob_ref[...]                   # (N, cmap_dim)
        res = jnp.sum(o * cmap_ref[...], axis=1, keepdims=True) * cmap_scale
        o_ref[...] = jnp.broadcast_to(res, o_ref.shape)  # lane-dense (N, 128)


# ---------------- helpers ----------------------------------------------------
def _pick_conv_batch(N, H, W, R2, Cin_p, C, vmem_limit):
    Wp = W + 2
    rows = H * Wp
    if rows % 8 != 0:          # keep the in-kernel flatten layout-trivial
        return 1
    # Target ~512 MXU rows per step (256-row passes on v6e/v7x, 128 on v5e).
    B = max(1, min(N, max(1, 512 // rows)))

    def vmem_ok(b):
        act = 2 * b * R2 * Cin_p * 2       # double-buffered bf16 activation block
        wgt = 9 * Cin_p * C * 2            # single-buffered resident weight
        out = 2 * b * H * W * C * 2        # double-buffered bf16 output block
        acc = b * rows * C * 4             # f32 accumulator + bf16 scratch (approx)
        return act + wgt + out + acc <= int(0.6 * vmem_limit)

    while B > 1 and not vmem_ok(B):
        B -= 1
    # B must divide N; keep >= 2 grid steps so both v7x TensorCores stay busy.
    while B > 1 and (N % B != 0 or N // B < 2):
        B -= 1
    return B


def _run_conv(xflat, w_conv, conv_b, *, N, B, H, W, R2, Cin_p, C, scale, vmem_limit):
    Wp = W + 2
    NB = N // B
    conv_flops = 2 * N * H * Wp * Cin_p * C * 9
    conv_bytes = (N * R2 * Cin_p + 9 * Cin_p * C + N * H * W * C) * 2 + C * 4

    def build(single_buffer_weights):
        resident = (dict(pipeline_mode=pl.Buffered(1))
                    if single_buffer_weights else {})
        return pl.pallas_call(
            functools.partial(conv3x3_kernel, H=H, W=W, scale=scale),
            grid=(NB,),
            out_shape=jax.ShapeDtypeStruct((N, H * W, C), jnp.bfloat16),
            in_specs=[
                pl.BlockSpec((B, R2, Cin_p), lambda n: (n, 0, 0)),
                pl.BlockSpec((9, Cin_p, C), lambda n: (0, 0, 0), **resident),
                pl.BlockSpec((1, C), lambda n: (0, 0), **resident),
            ],
            out_specs=pl.BlockSpec((B, H * W, C), lambda n: (n, 0, 0)),
            scratch_shapes=[pltpu.VMEM((B * H * Wp, C), jnp.bfloat16)],
            compiler_params=pltpu.CompilerParams(
                dimension_semantics=("parallel",),
                vmem_limit_bytes=vmem_limit),
            cost_estimate=pl.CostEstimate(flops=conv_flops, transcendentals=0,
                                          bytes_accessed=conv_bytes),
        )

    try:
        return build(True)(xflat, w_conv, conv_b)
    except Exception:
        # pipeline_mode=pl.Buffered(1) not supported on this jax build:
        # fall back to the default buffering of the constant-index weight.
        return build(False)(xflat, w_conv, conv_b)


# ---------------- Wrapper ----------------------------------------------------
def discriminator_epilogue(x, img, cmap, params, *, cmap_dim,
                           mbstd_group_size=4, mbstd_num_channels=1):
    # TODO(synk): architecture='skip' fromrgb 1x1-conv branch not implemented
    # (default architecture is 'resnet', where `img` is unused).
    del img
    assert mbstd_num_channels == 1
    assert cmap_dim > 0
    N, C, H, W = x.shape
    x = x.astype(jnp.float32)
    vmem_limit = _vmem_limit_bytes()

    # --- MinibatchStdLayer statistic (f32 VPU kernel over (G, M, D)) ---
    G = min(mbstd_group_size, N)
    assert N % G == 0
    M = N // G
    D_in = C * H * W
    mb = pl.pallas_call(
        functools.partial(mbstd_kernel, group_size=G),
        out_shape=jax.ShapeDtypeStruct((M, 128), jnp.float32),
        in_specs=[pl.BlockSpec(memory_space=pltpu.MemorySpace.VMEM)],
        out_specs=pl.BlockSpec(memory_space=pltpu.MemorySpace.VMEM),
        compiler_params=pltpu.CompilerParams(vmem_limit_bytes=vmem_limit),
        cost_estimate=pl.CostEstimate(
            flops=5 * N * D_in, transcendentals=M * D_in,
            bytes_accessed=N * D_in * 4 + M * 128 * 4),
    )(x.reshape(G, M, D_in))
    # TODO(synk): larger refactor — fuse this statistic into the conv kernel to
    # drop this extra f32 activation read (one mbstd group per grid step).
    std_per_n = jnp.tile(mb[:, 0], (G,))                  # image n -> stat[n % M]

    # --- Padded, channels-last, row-flattened bf16 activation (single buffer) ---
    Cin = C + 1
    Cin_p = _round_up(Cin, 128) if Cin >= 128 else _round_up(Cin, 8)
    Wp, Hp = W + 2, H + 2
    R = Hp * Wp
    R2 = _round_up(R + 2, 8)                              # room for the max row shift
    x_bf = jnp.transpose(x.astype(jnp.bfloat16), (0, 2, 3, 1))      # (N,H,W,C)
    std_bf = jnp.broadcast_to(
        std_per_n.astype(jnp.bfloat16)[:, None, None, None], (N, H, W, 1))
    xpad = jnp.zeros((N, Hp, Wp, Cin_p), jnp.bfloat16)    # spatial + channel pad
    xpad = lax.dynamic_update_slice(xpad, x_bf, (0, 1, 1, 0))
    xpad = lax.dynamic_update_slice(xpad, std_bf, (0, 1, 1, C))
    xflat = jnp.pad(xpad.reshape(N, R, Cin_p), ((0, 0), (0, R2 - R), (0, 0)))

    # conv weight: (Cout,Cin,3,3) -> (kh,kw,cin,cout) -> pad cin -> (9,Cin_p,C)
    w_r = jnp.transpose(params["conv_w"], (2, 3, 1, 0))
    w_r = jnp.pad(w_r, ((0, 0), (0, 0), (0, Cin_p - Cin), (0, 0)))
    w_conv = w_r.reshape(9, Cin_p, C).astype(jnp.bfloat16)
    conv_scale = float(LRELU_GAIN / np.sqrt(Cin * 9))     # weight_gain * act_gain
    conv_b = (params["conv_b"].reshape(1, C) * LRELU_GAIN).astype(jnp.float32)

    # --- Conv2dLayer 3x3 + bias + lrelu: B images per grid step ---
    B = _pick_conv_batch(N, H, W, R2, Cin_p, C, vmem_limit)
    conv_out = _run_conv(xflat, w_conv, conv_b, N=N, B=B, H=H, W=W, R2=R2,
                         Cin_p=Cin_p, C=C, scale=conv_scale,
                         vmem_limit=vmem_limit)            # (N, H*W, C) compact

    # --- Head: K-tiled fc + out + cmap projection ---
    D = C * H * W
    tk = min(2048, _round_up(D, 128))
    D_pad = _round_up(D, tk)
    Kt = D_pad // tk
    xf = conv_out.reshape(N, D)
    if D_pad != D:
        xf = jnp.pad(xf, ((0, 0), (0, D_pad - D)))
    # fc weight permuted so (h, w, c)-ordered activations match torch NCHW flatten
    fw = params["fc_w"].reshape(C, C, H, W).transpose(2, 3, 1, 0).reshape(D, C)
    if D_pad != D:
        fw = jnp.pad(fw, ((0, D_pad - D), (0, 0)))
    fw = fw.astype(jnp.bfloat16)
    fc_b = (params["fc_b"].reshape(1, C) * LRELU_GAIN).astype(jnp.float32)
    ow = params["out_w"].T.astype(jnp.float32)             # (C, cmap_dim), tiny
    ob = params["out_b"].reshape(1, cmap_dim).astype(jnp.float32)
    cmap_f = cmap.astype(jnp.float32)

    head_flops = 2 * N * D_pad * C + 2 * N * C * cmap_dim + 3 * N * cmap_dim
    head_bytes = (N * D_pad + D_pad * C) * 2 + (N * 128 + C + C * cmap_dim
                                                + cmap_dim + N * cmap_dim) * 4
    head = pl.pallas_call(
        functools.partial(head_kernel,
                          fc_scale=float(LRELU_GAIN / np.sqrt(D)),
                          out_gain=float(1.0 / np.sqrt(C)),
                          cmap_scale=float(1.0 / np.sqrt(cmap_dim))),
        grid=(Kt,),
        out_shape=jax.ShapeDtypeStruct((N, 128), jnp.float32),
        in_specs=[
            pl.BlockSpec((N, tk), lambda k: (0, k)),
            pl.BlockSpec((tk, C), lambda k: (k, 0)),
            pl.BlockSpec((1, C), lambda k: (0, 0)),
            pl.BlockSpec((C, cmap_dim), lambda k: (0, 0)),
            pl.BlockSpec((1, cmap_dim), lambda k: (0, 0)),
            pl.BlockSpec((N, cmap_dim), lambda k: (0, 0)),
        ],
        out_specs=pl.BlockSpec((N, 128), lambda k: (0, 0)),
        scratch_shapes=[pltpu.VMEM((N, C), jnp.float32)],
        compiler_params=pltpu.CompilerParams(
            dimension_semantics=("arbitrary",),
            vmem_limit_bytes=vmem_limit),
        cost_estimate=pl.CostEstimate(flops=head_flops, transcendentals=0,
                                      bytes_accessed=head_bytes),
    )(xf, fw, fc_b, ow, ob, cmap_f)
    return head[:, :1]


# ---------------- Pure-JAX f32 reference (mirrors the PyTorch math) ----------
def ref_forward(x, cmap, params, *, cmap_dim, mbstd_group_size=4):
    N, C, H, W = x.shape
    x = x.astype(jnp.float32)
    G = min(mbstd_group_size, N)
    M = N // G
    y = x.reshape(G, M, 1, C, H, W)
    y = y - y.mean(axis=0)
    y = (y * y).mean(axis=0)
    y = jnp.sqrt(y + 1e-8)
    y = y.mean(axis=(2, 3, 4)).reshape(M, 1, 1, 1)
    y = jnp.tile(y, (G, 1, H, W))
    xc = jnp.concatenate([x, y], axis=1)
    wg = 1.0 / np.sqrt((C + 1) * 9)
    conv = jax.lax.conv_general_dilated(
        xc, params["conv_w"] * wg, (1, 1), ((1, 1), (1, 1)),
        dimension_numbers=("NCHW", "OIHW", "NCHW"),
        precision=jax.lax.Precision.HIGHEST)
    conv = jax.nn.leaky_relu(conv + params["conv_b"][None, :, None, None],
                             LRELU_ALPHA) * LRELU_GAIN
    xf = conv.reshape(N, -1)
    h = jnp.matmul(xf, params["fc_w"].T * (1.0 / np.sqrt(C * H * W)),
                   precision=jax.lax.Precision.HIGHEST) + params["fc_b"]
    h = jax.nn.leaky_relu(h, LRELU_ALPHA) * LRELU_GAIN
    o = jnp.matmul(h, params["out_w"].T * (1.0 / np.sqrt(C)),
                   precision=jax.lax.Precision.HIGHEST) + params["out_b"]
    return jnp.sum(o * cmap, axis=1, keepdims=True) * (1.0 / np.sqrt(cmap_dim))


if __name__ == "__main__":
    key = jax.random.PRNGKey(0)
    N, C, H, W = 4, 4, 8, 8            # batch, in_channels, resolution, resolution
    cmap_dim = 8
    img_channels = 3
    ks = jax.random.split(key, 6)

    x = jax.random.normal(ks[0], (N, C, H, W), jnp.float32)
    img = jax.random.normal(ks[1], (N, img_channels, H, W), jnp.float32)  # unused ('resnet')
    cmap = jax.random.normal(ks[2], (N, cmap_dim), jnp.float32)

    params = {
        "conv_w": jax.random.normal(ks[3], (C, C + 1, 3, 3), jnp.float32),
        "conv_b": jnp.zeros((C,), jnp.float32),
        "fc_w": jax.random.normal(ks[4], (C, C * H * W), jnp.float32),
        "fc_b": jnp.zeros((C,), jnp.float32),
        "out_w": jax.random.normal(ks[5], (cmap_dim, C), jnp.float32),
        "out_b": jnp.zeros((cmap_dim,), jnp.float32),
    }

    out = discriminator_epilogue(x, img, cmap, params, cmap_dim=cmap_dim)
    out = jax.block_until_ready(out)
    ref = ref_forward(x, cmap, params, cmap_dim=cmap_dim)

    assert out.shape == (N, 1) and out.dtype == jnp.float32
    # bf16 MXU operands with f32 accumulation -> slightly looser tolerance vs f32 ref
    np.testing.assert_allclose(np.asarray(out), np.asarray(ref), rtol=2e-2, atol=5e-2)
    print("KERNEL_OK")
</pallas_src>

<mosaic_0001>
module attributes {stable_mosaic.version = 11 : i64} {
  func.func @mbstd_kernel(%arg0: memref<4x1x256xf32, #tpu.memory_space<vmem>>, %arg1: memref<1x128xf32, #tpu.memory_space<vmem>>) attributes {dimension_semantics = [], scalar_prefetch = 0 : i64, scratch_operands = 0 : i64, tpu.core_type = #tpu.core_type<tc>} {
    %c0 = arith.constant 0 : index
    %c0_0 = arith.constant 0 : index
    %c0_1 = arith.constant 0 : index
    %0 = vector.load %arg0[%c0, %c0_0, %c0_1] : memref<4x1x256xf32, #tpu.memory_space<vmem>>, vector<1x1x256xf32>
    %1 = vector.shape_cast %0 : vector<1x1x256xf32> to vector<1x256xf32>
    %c1 = arith.constant 1 : index
    %c0_2 = arith.constant 0 : index
    %c0_3 = arith.constant 0 : index
    %2 = vector.load %arg0[%c1, %c0_2, %c0_3] : memref<4x1x256xf32, #tpu.memory_space<vmem>>, vector<1x1x256xf32>
    %3 = vector.shape_cast %2 : vector<1x1x256xf32> to vector<1x256xf32>
    %4 = arith.addf %1, %3 : vector<1x256xf32>
    %c2 = arith.constant 2 : index
    %c0_4 = arith.constant 0 : index
    %c0_5 = arith.constant 0 : index
    %5 = vector.load %arg0[%c2, %c0_4, %c0_5] : memref<4x1x256xf32, #tpu.memory_space<vmem>>, vector<1x1x256xf32>
    %6 = vector.shape_cast %5 : vector<1x1x256xf32> to vector<1x256xf32>
    %7 = arith.addf %4, %6 : vector<1x256xf32>
    %c3 = arith.constant 3 : index
    %c0_6 = arith.constant 0 : index
    %c0_7 = arith.constant 0 : index
    %8 = vector.load %arg0[%c3, %c0_6, %c0_7] : memref<4x1x256xf32, #tpu.memory_space<vmem>>, vector<1x1x256xf32>
    %9 = vector.shape_cast %8 : vector<1x1x256xf32> to vector<1x256xf32>
    %10 = arith.addf %7, %9 : vector<1x256xf32>
    %cst = arith.constant 2.500000e-01 : f32
    %11 = vector.broadcast %cst : f32 to vector<1x256xf32>
    %12 = arith.mulf %10, %11 : vector<1x256xf32>
    %13 = arith.subf %1, %12 : vector<1x256xf32>
    %14 = arith.mulf %13, %13 : vector<1x256xf32>
    %c1_8 = arith.constant 1 : index
    %c0_9 = arith.constant 0 : index
    %c0_10 = arith.constant 0 : index
    %15 = vector.load %arg0[%c1_8, %c0_9, %c0_10] : memref<4x1x256xf32, #tpu.memory_space<vmem>>, vector<1x1x256xf32>
    %16 = vector.shape_cast %15 : vector<1x1x256xf32> to vector<1x256xf32>
    %17 = arith.subf %16, %12 : vector<1x256xf32>
    %18 = arith.mulf %17, %17 : vector<1x256xf32>
    %19 = arith.addf %14, %18 : vector<1x256xf32>
    %c2_11 = arith.constant 2 : index
    %c0_12 = arith.constant 0 : index
    %c0_13 = arith.constant 0 : index
    %20 = vector.load %arg0[%c2_11, %c0_12, %c0_13] : memref<4x1x256xf32, #tpu.memory_space<vmem>>, vector<1x1x256xf32>
    %21 = vector.shape_cast %20 : vector<1x1x256xf32> to vector<1x256xf32>
    %22 = arith.subf %21, %12 : vector<1x256xf32>
    %23 = arith.mulf %22, %22 : vector<1x256xf32>
    %24 = arith.addf %19, %23 : vector<1x256xf32>
    %c3_14 = arith.constant 3 : index
    %c0_15 = arith.constant 0 : index
    %c0_16 = arith.constant 0 : index
    %25 = vector.load %arg0[%c3_14, %c0_15, %c0_16] : memref<4x1x256xf32, #tpu.memory_space<vmem>>, vector<1x1x256xf32>
    %26 = vector.shape_cast %25 : vector<1x1x256xf32> to vector<1x256xf32>
    %27 = arith.subf %26, %12 : vector<1x256xf32>
    %28 = arith.mulf %27, %27 : vector<1x256xf32>
    %29 = arith.addf %24, %28 : vector<1x256xf32>
    %cst_17 = arith.constant 2.500000e-01 : f32
    %30 = vector.broadcast %cst_17 : f32 to vector<1x256xf32>
    %31 = arith.mulf %29, %30 : vector<1x256xf32>
    %cst_18 = arith.constant 9.99999993E-9 : f32
    %32 = vector.broadcast %cst_18 : f32 to vector<1x256xf32>
    %33 = arith.addf %31, %32 : vector<1x256xf32>
    %34 = math.sqrt %33 : vector<1x256xf32>
    %cst_19 = arith.constant dense<0.000000e+00> : vector<1xf32>
    %35 = vector.multi_reduction <add>, %34, %cst_19 [1] : vector<1x256xf32> to vector<1xf32>
    %36 = vector.shape_cast %35 : vector<1xf32> to vector<1x1xf32>
    %cst_20 = arith.constant 2.560000e+02 : f32
    %37 = vector.broadcast %cst_20 : f32 to vector<1x1xf32>
    %38 = arith.divf %36, %37 : vector<1x1xf32>
    %39 = vector.shape_cast %38 : vector<1x1xf32> to vector<1x1xf32>
    %40 = vector.broadcast %39 : vector<1x1xf32> to vector<1x128xf32>
    %c0_21 = arith.constant 0 : index
    %c0_22 = arith.constant 0 : index
    %41 = vector.load %arg1[%c0_21, %c0_22] : memref<1x128xf32, #tpu.memory_space<vmem>>, vector<1x128xf32>
    tpu.vector_store %arg1[%c0_21, %c0_22], %40 {strides = array<i32>} : memref<1x128xf32, #tpu.memory_space<vmem>>, vector<1x128xf32>,
    return
  }
}

</mosaic_0001>

<llo_original>
// kernel: tpu_custom_call.1
$region0: #{tpu_custom_call.1}
  #allocation0 [shape = 'u32[]', space=smem, size = 0x4, offset = 0x4, fixed_abs, tag = 'smem constant byte address 0x4 - core index']
  #allocation1 [shape = 'u32[144,128]{1,0:T(1,128)}', space=vmem, size = 0x12000, scoped, tag = 'internal scratch']
  %s0 = inlined_call_operand.hbm [shape: f32[4,1,256], index: 0, kind: input, shape index: {}]
  %s1 = inlined_call_operand.hbm [shape: f32[1,128], index: 1, kind: output, shape index: {}]
  %s2 = sld [smem:[#allocation0]]
  $region18: #{tpu_custom_call.1} parent=0
    _
  %s4 = ssub.s32 1, %s2
  %s5 = scalar_select 0, %s4, %s2
  $region1: #{tpu_custom_call.1} parent=0
    #allocation2 [shape = 'u8[4096]{0}', space=vmem, size = 0x1000, scoped, tag = 'input window, operand 0, single buffered']
    #allocation3 [shape = 's32[1]{0}', space=sflag, size = 0x4, scoped, tag = 'scoped memory for tpu_custom_call.1']
    #allocation4 [shape = 's32[1]{0}', space=sflag, size = 0x4, scoped, tag = 'scoped memory for tpu_custom_call.1']
    #allocation5 [shape = 'u8[512]{0}', space=vmem, size = 0x400, scoped, tag = 'output window, operand 0, single buffered']
    %6 = vsyncpa [#allocation3], 0
    %7 = vsyncpa [#allocation4], 0
    // Predicated region
    $region2: #{tpu_custom_call.1} parent=1 // pred_check
      _
    $region3: #{tpu_custom_call.1} parent=1 // pred_check_branch
      %9 = sbr.rel (0) target = $region5
    $region4: #{tpu_custom_call.1} parent=1 // pred_region
      %s11 = ssub.s32 128, 128
      %12 = vsyncadd [#allocation3], %s11
      %s13 = sshll.u32 [#allocation2], 4
      %s14 = int_to_ptr.vmem [resolvable:$true] %s13
      %19 = dma.hbm_to_vmem [thread:$0]  %s0, 128, %s14, [#allocation3], 32, 32, 2
    $region5: #{tpu_custom_call.1} parent=1 // pred_fallthru
      _
    // Predicated region
    $region6: #{tpu_custom_call.1} parent=1 // pred_check
      _
    $region7: #{tpu_custom_call.1} parent=1 // pred_check_branch
      %21 = sbr.rel (0) target = $region9
    $region8: #{tpu_custom_call.1} parent=1 // pred_region
      %22 = dma.done [#allocation3], 128
    $region9: #{tpu_custom_call.1} parent=1 // pred_fallthru
      _
    %v23 = vld [vmem:[#allocation2] sm:$0x3]
    %s24 = scalar_lea.vmem [#allocation2], 2
    %v25 = vld [vmem:[%s24] sm:$0x3]
    %v26 = vadd.f32 %v23, %v25
    %s27 = scalar_lea.vmem [#allocation2], 4
    %v28 = vld [vmem:[%s27] sm:$0x3]
    %v29 = vadd.f32 %v26, %v28
    %s30 = scalar_lea.vmem [#allocation2], 6
    %v31 = vld [vmem:[%s30] sm:$0x3]
    %v32 = vadd.f32 %v29, %v31
    %v33 = vmul.f32 %v32, 0.25
    %v34 = vsub.f32 %v23, %v33
    %v35 = vmul.f32 %v34, %v34
    %v36 = vsub.f32 %v25, %v33
    %v37 = vmul.f32 %v36, %v36
    %v38 = vadd.f32 %v35, %v37
    %v39 = vsub.f32 %v28, %v33
    %v40 = vmul.f32 %v39, %v39
    %v41 = vadd.f32 %v38, %v40
    %v42 = vsub.f32 %v31, %v33
    %v43 = vmul.f32 %v42, %v42
    %v44 = vadd.f32 %v41, %v43
    %v45 = vmul.f32 %v44, 0.25
    %v46 = vadd.f32 %v45, 1e-08
    %v47 = vrsqrt.pop %v46
    %v48 = vmul.f32 %v46, %v47
    %vm49 = vcmp.eq.f32.partialorder %v46, inf
    %v50 = vsel %vm49, %v46, %v48
    %vm51 = vcmp.eq.f32.partialorder %v46, 0.0
    %v52 = vand.u32 %v46, 2147483648
    %v53 = vsel %vm51, %v52, %v50
    %v55 = vlaneseq
    %v56 = vshrl.u32 %v55, 7
    %v57 = vsub.s32 0, %v56
    %v58 = vrot.slane %v53, %v57
    %v59 = vlaneseq
    %v60 = vshrl.u32 %v59, 7
    %v61 = vsub.s32 1, %v60
    %v62 = vrot.slane %v53, %v61
    %vm65 = vcmask 1040384
    %v66 = vsel %vm65, %v58, 0.0
    %v67 = vsel %vm65, %v62, 0.0
    %v68 = vadd.f32 %v66, %v67
    %69 = vadd.xlane.f32.xlu0 %v68
    %v70 = vpop.xlane.xlu0 %69
    %v71 = vrcp.pop 256.0
    %v72 = vmul.f32 %v70, %v71
    %73 = vst [vmem:[#allocation5] sm:$0x1] %v72
    // Predicated region
    $region10: #{tpu_custom_call.1} parent=1 // pred_check
      _
    $region11: #{tpu_custom_call.1} parent=1 // pred_check_branch
      %75 = sbr.rel (0) target = $region13
    $region12: #{tpu_custom_call.1} parent=1 // pred_region
      %s77 = ssub.s32 16, 16
      %78 = vsyncadd [#allocation4], %s77
      %s80 = sshll.u32 [#allocation5], 4
      %s81 = int_to_ptr.vmem [resolvable:$true] %s80
      %83 = dma.vmem_to_hbm [thread:$0]  %s81, 16, %s1, [#allocation4]
    $region13: #{tpu_custom_call.1} parent=1 // pred_fallthru
      _
    // Predicated region
    $region14: #{tpu_custom_call.1} parent=1 // pred_check
      _
    $region15: #{tpu_custom_call.1} parent=1 // pred_check_branch
      %85 = sbr.rel (0) target = $region17
    $region16: #{tpu_custom_call.1} parent=1 // pred_region
      %86 = dma.done [#allocation4], 16
    $region17: #{tpu_custom_call.1} parent=1 // pred_fallthru
      _
    %87 = vsyncpa [#allocation3], 1
    %88 = vsyncpa [#allocation4], 1

</llo_original>
